<compile_context>
chip_gen: v7x
topology: tpu7x:2x2x1
jax: 0.10.0
libtpu: 0.0.40
codegen_flags: <defaults>
</compile_context>

<pallas_src>
import jax
import jax.numpy as jnp
from jax.experimental import pallas as pl
from jax.experimental.pallas import tpu as pltpu


def _round_up(a, b):
    return ((a + b - 1) // b) * b


# ----------------------------- kernels --------------------------------------


def _head_kernel(x_ref, w_ref, b_ref, o_ref):
    # x_ref: [TM, nf] (stored dtype), w_ref: [nf, TW_pad] resident,
    # b_ref: [1, TW_pad] f32, o_ref: [TM, TW_pad]
    x = x_ref[...]
    if x.dtype != w_ref.dtype:
        x = x.astype(w_ref.dtype)  # in-kernel cast, hidden under the MXU matmul
    acc = jnp.dot(x, w_ref[...], preferred_element_type=jnp.float32)
    o_ref[...] = (acc + b_ref[...]).astype(o_ref.dtype)
    # TODO(synk): Dropout is identity at inference (p=0 default); no RNG masking emitted.


def _head_kernel_ktiled(x_ref, w_ref, b_ref, o_ref, acc_ref):
    # x_ref: [TM, TK], w_ref: [TK, TW_pad] (streamed over K), acc_ref f32 scratch.
    k = pl.program_id(1)

    @pl.when(k == 0)
    def _():
        acc_ref[...] = jnp.zeros_like(acc_ref)

    x = x_ref[...]
    if x.dtype != w_ref.dtype:
        x = x.astype(w_ref.dtype)
    acc_ref[...] += jnp.dot(x, w_ref[...], preferred_element_type=jnp.float32)

    @pl.when(k == pl.num_programs(1) - 1)
    def _():
        o_ref[...] = (acc_ref[...] + b_ref[...]).astype(o_ref.dtype)


# --------------------------- parameter prep ---------------------------------


def prepare_flatten_head_params(weight, bias, compute_dtype=None):
    """One-time parameter prep (do NOT call per forward).

    weight: [target_window, nf] (torch nn.Linear layout), bias: [target_window].
    Returns (w_t_pad [nf, tw_pad], bias_pad [1, tw_pad] f32, target_window).
    """
    tw, nf = weight.shape
    tw_pad = _round_up(max(tw, 128), 128)          # lane-dense output stores
    w_t = weight.T                                  # [nf, tw] — done once here
    if compute_dtype is not None:
        w_t = w_t.astype(compute_dtype)
    w_t = jnp.pad(w_t, ((0, 0), (0, tw_pad - tw)))
    b2d = jnp.pad(bias.astype(jnp.float32), (0, tw_pad - tw)).reshape(1, tw_pad)
    return w_t, b2d, tw


# --------------------------- sizing helpers ----------------------------------


def _vmem_budget_bytes():
    """Per-chip working-set budget and scoped-VMEM limit to request."""
    try:
        cap = int(pltpu.get_tpu_info().vmem_capacity_bytes)
    except Exception:
        cap = 64 * 1024 * 1024          # conservative fallback (v7x per-TC VMEM)
    budget = cap // 2                   # 64 MiB on v5e/v6e, 32 MiB on v7x
    vmem_limit = min(cap, budget + (16 << 20))
    return budget, vmem_limit


def _choose_tm(M, budget_bytes, fixed_bytes, per_row_bytes, sublane):
    """Largest TM in {512, 256, ...} whose working set fits the budget."""
    tm = 512
    while tm > sublane and fixed_bytes + tm * per_row_bytes > budget_bytes:
        tm //= 2
    tm = max(sublane, tm)
    tm = min(tm, _round_up(M, sublane))
    if M >= 256:
        # Keep >= 2 M tiles so the "parallel" axis can span both TensorCores
        # on v7x (near-free on 1-TC chips at these sizes).
        tm = min(tm, _round_up(-(-M // 2), sublane))
    return tm


# ------------------------------ forward --------------------------------------


def flatten_head_apply(x, w_t_pad, b2d, target_window, *, force_k_tiling=False):
    """x: [B, n_vars, d_model, patch_num]; w_t_pad: [nf, tw_pad]; b2d: [1, tw_pad]."""
    B, n_vars, d_model, patch_num = x.shape
    nf = d_model * patch_num
    nf_w, tw_pad = w_t_pad.shape
    assert nf_w == nf, f"weight expects nf={nf_w}, got {nf}"

    out_dtype = x.dtype
    # Flatten(start_dim=-2) + merge (B, n_vars): trailing-dim merge, free view.
    x2d = x.reshape(B * n_vars, nf)
    M = B * n_vars

    x_bytes = jnp.dtype(x2d.dtype).itemsize
    w_bytes = jnp.dtype(w_t_pad.dtype).itemsize
    out_bytes = jnp.dtype(out_dtype).itemsize
    sublane = max(8, 32 // x_bytes)          # 8 for f32, 16 for bf16, 32 for 8-bit

    budget, vmem_limit = _vmem_budget_bytes()
    cparams = dict(vmem_limit_bytes=int(vmem_limit))

    w_resident = nf * tw_pad * w_bytes       # single-buffered resident weight
    use_k_tiling = force_k_tiling or (w_resident > budget // 2)

    if not use_k_tiling:
        per_row = 2 * nf * x_bytes + 2 * tw_pad * out_bytes
        fixed = w_resident + 2 * tw_pad * 4
        tm = _choose_tm(M, budget, fixed, per_row, sublane)
        grid = (pl.cdiv(M, tm),)

        def call(single_buffer_resident):
            resident_kw = (
                dict(pipeline_mode=pl.Buffered(1)) if single_buffer_resident else {}
            )
            return pl.pallas_call(
                _head_kernel,
                out_shape=jax.ShapeDtypeStruct((M, tw_pad), out_dtype),
                grid_spec=pltpu.PrefetchScalarGridSpec(
                    num_scalar_prefetch=0,
                    grid=grid,
                    in_specs=[
                        pl.BlockSpec((tm, nf), lambda i: (i, 0)),        # streamed x
                        pl.BlockSpec((nf, tw_pad), lambda i: (0, 0), **resident_kw),
                        pl.BlockSpec((1, tw_pad), lambda i: (0, 0), **resident_kw),
                    ],
                    out_specs=pl.BlockSpec((tm, tw_pad), lambda i: (i, 0)),
                ),
                compiler_params=pltpu.CompilerParams(
                    dimension_semantics=("parallel",), **cparams
                ),
            )(x2d, w_t_pad, b2d)

        try:
            out = call(True)
        except Exception:
            # Installed jax may not accept Buffered(1); fall back to default
            # double-buffered resident specs (budget has headroom for this).
            out = call(False)
    else:
        # K-tiled fallback: stream the weight over the contraction dim and
        # accumulate in an f32 VMEM scratch.
        w = w_t_pad
        if nf % 128 != 0:
            # Rare fallback: pad the contraction dim so a 128-multiple K tile
            # divides it (extra HBM pass only on this already-huge-head path).
            nf_p = _round_up(nf, 128)
            x2d = jnp.pad(x2d, ((0, 0), (0, nf_p - nf)))
            w = jnp.pad(w, ((0, nf_p - nf), (0, 0)))
            nf = nf_p
        tk = 128
        t = 256
        while t <= min(nf, 2048):
            if nf % t == 0 and 2 * t * tw_pad * w_bytes <= budget // 3:
                tk = t
            t += 128

        per_row = 2 * tk * x_bytes + 2 * tw_pad * out_bytes + 4 * tw_pad
        fixed = 2 * tk * tw_pad * w_bytes + 2 * tw_pad * 4
        tm = _choose_tm(M, budget, fixed, per_row, sublane)
        grid = (pl.cdiv(M, tm), nf // tk)

        def call(single_buffer_resident):
            resident_kw = (
                dict(pipeline_mode=pl.Buffered(1)) if single_buffer_resident else {}
            )
            return pl.pallas_call(
                _head_kernel_ktiled,
                out_shape=jax.ShapeDtypeStruct((M, tw_pad), out_dtype),
                grid_spec=pltpu.PrefetchScalarGridSpec(
                    num_scalar_prefetch=0,
                    grid=grid,
                    in_specs=[
                        pl.BlockSpec((tm, tk), lambda i, k: (i, k)),     # streamed x
                        pl.BlockSpec((tk, tw_pad), lambda i, k: (k, 0)), # streamed w
                        pl.BlockSpec((1, tw_pad), lambda i, k: (0, 0), **resident_kw),
                    ],
                    out_specs=pl.BlockSpec((tm, tw_pad), lambda i, k: (i, 0)),
                    scratch_shapes=[pltpu.VMEM((tm, tw_pad), jnp.float32)],
                ),
                compiler_params=pltpu.CompilerParams(
                    dimension_semantics=("parallel", "arbitrary"), **cparams
                ),
            )(x2d, w, b2d)

        try:
            out = call(True)
        except Exception:
            out = call(False)

    out = out[:, :target_window]
    return out.reshape(B, n_vars, target_window)


# ------------------------------ reference ------------------------------------


def flatten_head_ref(x, weight, bias):
    B, n_vars, d_model, patch_num = x.shape
    x2d = x.reshape(B, n_vars, d_model * patch_num)
    return jnp.einsum("bvn,tn->bvt", x2d, weight) + bias


# -------------------------------- tests --------------------------------------


if __name__ == "__main__":
    key = jax.random.PRNGKey(0)

    def make_case(k, B, n_vars, d_model, patch_num, tw):
        nf = d_model * patch_num
        kx, kw, kb = jax.random.split(k, 3)
        x = jax.random.normal(kx, (B, n_vars, d_model, patch_num), dtype=jnp.float32)
        bound = 1.0 / jnp.sqrt(jnp.float32(nf))
        weight = jax.random.uniform(kw, (tw, nf), jnp.float32, -bound, bound)
        bias = jax.random.uniform(kb, (tw,), jnp.float32, -bound, bound)
        return x, weight, bias

    k1, k2, k3 = jax.random.split(key, 3)

    # 1) Small PatchTST head, f32 path (matches PyTorch numerics exactly).
    B, n_vars, d_model, patch_num, tw = 2, 4, 16, 8, 32
    x, weight, bias = make_case(k1, B, n_vars, d_model, patch_num, tw)
    ref = flatten_head_ref(x, weight, bias)
    w_t, b2d, tw_out = prepare_flatten_head_params(weight, bias)
    out = jax.block_until_ready(flatten_head_apply(x, w_t, b2d, tw_out))
    assert out.shape == (B, n_vars, tw)
    assert jnp.allclose(out, ref, atol=1e-5, rtol=1e-5), "f32 mismatch vs reference"

    # 2) bf16 weight path (MXU-native); x stays f32 in HBM, cast inside kernel.
    w_bt, b_bt, _ = prepare_flatten_head_params(weight, bias, compute_dtype=jnp.bfloat16)
    out_bf = jax.block_until_ready(flatten_head_apply(x, w_bt, b_bt, tw_out))
    assert out_bf.shape == (B, n_vars, tw)
    assert jnp.allclose(out_bf, ref, atol=5e-2, rtol=5e-2), "bf16 mismatch vs reference"

    # 3) K-tiled accumulator path (forced; exercises the large-weight fallback).
    Bk, nvk, dmk, pnk, twk = 2, 4, 256, 16, 32       # nf = 4096 -> 2 K tiles
    xk, wk, bk = make_case(k2, Bk, nvk, dmk, pnk, twk)
    refk = flatten_head_ref(xk, wk, bk)
    w_tk, b2dk, twk_out = prepare_flatten_head_params(wk, bk)
    outk = jax.block_until_ready(
        flatten_head_apply(xk, w_tk, b2dk, twk_out, force_k_tiling=True)
    )
    assert outk.shape == (Bk, nvk, twk)
    assert jnp.allclose(outk, refk, atol=5e-4, rtol=5e-4), "K-tiled mismatch vs reference"

    # 4) Partial last M-tile (M = 520 not a multiple of TM; no wrapper pad).
    Bp, nvp = 65, 8
    xp, wp, bp = make_case(k3, Bp, nvp, d_model, patch_num, tw)
    refp = flatten_head_ref(xp, wp, bp)
    w_tp, b2dp, twp_out = prepare_flatten_head_params(wp, bp)
    outp = jax.block_until_ready(flatten_head_apply(xp, w_tp, b2dp, twp_out))
    assert outp.shape == (Bp, nvp, tw)
    assert jnp.allclose(outp, refp, atol=1e-5, rtol=1e-5), "partial-tile mismatch"

    print("KERNEL_OK")
</pallas_src>

<mosaic_0001>
module attributes {stable_mosaic.version = 11 : i64} {
  func.func @_head_kernel(%arg0: i32, %arg1: memref<8x128xf32, #tpu.memory_space<vmem>>, %arg2: memref<128x128xf32, #tpu.memory_space<vmem>>, %arg3: memref<1x128xf32, #tpu.memory_space<vmem>>, %arg4: memref<8x128xf32, #tpu.memory_space<vmem>>) attributes {dimension_semantics = [#tpu.dimension_semantics<parallel>], iteration_bounds = array<i64: 1>, scalar_prefetch = 0 : i64, scratch_operands = 0 : i64, tpu.core_type = #tpu.core_type<tc>, window_params = [{transform_indices = @transform_0, window_bounds = array<i64: 8, 128>}, {pipeline_mode = #tpu.pipeline_mode<synchronous>, transform_indices = @transform_1, window_bounds = array<i64: 128, 128>}, {pipeline_mode = #tpu.pipeline_mode<synchronous>, transform_indices = @transform_2, window_bounds = array<i64: 1, 128>}, {transform_indices = @transform_3, window_bounds = array<i64: 8, 128>}]} {
    %c0 = arith.constant 0 : index
    %c0_0 = arith.constant 0 : index
    %0 = vector.load %arg1[%c0, %c0_0] : memref<8x128xf32, #tpu.memory_space<vmem>>, vector<8x128xf32>
    %c0_1 = arith.constant 0 : index
    %c0_2 = arith.constant 0 : index
    %1 = vector.load %arg2[%c0_1, %c0_2] : memref<128x128xf32, #tpu.memory_space<vmem>>, vector<128x128xf32>
    %cst = arith.constant dense<0.000000e+00> : vector<8x128xf32>
    %2 = tpu.matmul %0, %1, %cst {dimension_numbers = #tpu.dot_dimension_numbers<[1], [0], [0], [1], [0, 0, 1, 1], [], []>} : vector<8x128xf32>, vector<128x128xf32>, vector<8x128xf32> -> vector<8x128xf32>
    %c0_3 = arith.constant 0 : index
    %c0_4 = arith.constant 0 : index
    %3 = vector.load %arg3[%c0_3, %c0_4] : memref<1x128xf32, #tpu.memory_space<vmem>>, vector<1x128xf32>
    %4 = vector.broadcast %3 : vector<1x128xf32> to vector<8x128xf32>
    %5 = arith.addf %2, %4 : vector<8x128xf32>
    %c0_5 = arith.constant 0 : index
    %c0_6 = arith.constant 0 : index
    %6 = vector.load %arg4[%c0_5, %c0_6] : memref<8x128xf32, #tpu.memory_space<vmem>>, vector<8x128xf32>
    tpu.vector_store %arg4[%c0_5, %c0_6], %5 {strides = array<i32>} : memref<8x128xf32, #tpu.memory_space<vmem>>, vector<8x128xf32>,
    return
  }
  func.func @transform_0(%arg0: i32) -> (i32, i32) {
    %c0_i32 = arith.constant 0 : i32
    %c0_i32_0 = arith.constant 0 : i32
    return %arg0, %c0_i32 : i32, i32
  }
  func.func @transform_1(%arg0: i32) -> (i32, i32) {
    %c0_i32 = arith.constant 0 : i32
    %c0_i32_0 = arith.constant 0 : i32
    %c0_i32_1 = arith.constant 0 : i32
    return %c0_i32, %c0_i32_0 : i32, i32
  }
  func.func @transform_2(%arg0: i32) -> (i32, i32) {
    %c0_i32 = arith.constant 0 : i32
    %c0_i32_0 = arith.constant 0 : i32
    %c0_i32_1 = arith.constant 0 : i32
    return %c0_i32, %c0_i32_0 : i32, i32
  }
  func.func @transform_3(%arg0: i32) -> (i32, i32) {
    %c0_i32 = arith.constant 0 : i32
    %c0_i32_0 = arith.constant 0 : i32
    return %arg0, %c0_i32 : i32, i32
  }
}

module attributes {stable_mosaic.version = 11 : i64} {
  func.func @_head_kernel(%arg0: i32, %arg1: memref<8x128xf32, #tpu.memory_space<vmem>>, %arg2: memref<128x128xf32, #tpu.memory_space<vmem>>, %arg3: memref<1x128xf32, #tpu.memory_space<vmem>>, %arg4: memref<8x128xf32, #tpu.memory_space<vmem>>) attributes {dimension_semantics = [#tpu.dimension_semantics<parallel>], iteration_bounds = array<i64: 1>, scalar_prefetch = 0 : i64, scratch_operands = 0 : i64, tpu.core_type = #tpu.core_type<tc>, window_params = [{transform_indices = @transform_0, window_bounds = array<i64: 8, 128>}, {pipeline_mode = #tpu.pipeline_mode<synchronous>, transform_indices = @transform_1, window_bounds = array<i64: 128, 128>}, {pipeline_mode = #tpu.pipeline_mode<synchronous>, transform_indices = @transform_2, window_bounds = array<i64: 1, 128>}, {transform_indices = @transform_3, window_bounds = array<i64: 8, 128>}]} {
    %c0 = arith.constant 0 : index
    %c0_0 = arith.constant 0 : index
    %0 = vector.load %arg1[%c0, %c0_0] : memref<8x128xf32, #tpu.memory_space<vmem>>, vector<8x128xf32>
    %c0_1 = arith.constant 0 : index
    %c0_2 = arith.constant 0 : index
    %1 = vector.load %arg2[%c0_1, %c0_2] : memref<128x128xf32, #tpu.memory_space<vmem>>, vector<128x128xf32>
    %cst = arith.constant dense<0.000000e+00> : vector<8x128xf32>
    %2 = tpu.matmul %0, %1, %cst {dimension_numbers = #tpu.dot_dimension_numbers<[1], [0], [0], [1], [0, 0, 1, 1], [], []>} : vector<8x128xf32>, vector<128x128xf32>, vector<8x128xf32> -> vector<8x128xf32>
    %c0_3 = arith.constant 0 : index
    %c0_4 = arith.constant 0 : index
    %3 = vector.load %arg3[%c0_3, %c0_4] : memref<1x128xf32, #tpu.memory_space<vmem>>, vector<1x128xf32>
    %4 = vector.broadcast %3 : vector<1x128xf32> to vector<8x128xf32>
    %5 = arith.addf %2, %4 : vector<8x128xf32>
    %c0_5 = arith.constant 0 : index
    %c0_6 = arith.constant 0 : index
    %6 = vector.load %arg4[%c0_5, %c0_6] : memref<8x128xf32, #tpu.memory_space<vmem>>, vector<8x128xf32>
    tpu.vector_store %arg4[%c0_5, %c0_6], %5 {strides = array<i32>} : memref<8x128xf32, #tpu.memory_space<vmem>>, vector<8x128xf32>,
    return
  }
  func.func @transform_0(%arg0: i32) -> (i32, i32) {
    %c0_i32 = arith.constant 0 : i32
    %c0_i32_0 = arith.constant 0 : i32
    return %arg0, %c0_i32 : i32, i32
  }
  func.func @transform_1(%arg0: i32) -> (i32, i32) {
    %c0_i32 = arith.constant 0 : i32
    %c0_i32_0 = arith.constant 0 : i32
    %c0_i32_1 = arith.constant 0 : i32
    return %c0_i32, %c0_i32_0 : i32, i32
  }
  func.func @transform_2(%arg0: i32) -> (i32, i32) {
    %c0_i32 = arith.constant 0 : i32
    %c0_i32_0 = arith.constant 0 : i32
    %c0_i32_1 = arith.constant 0 : i32
    return %c0_i32, %c0_i32_0 : i32, i32
  }
  func.func @transform_3(%arg0: i32) -> (i32, i32) {
    %c0_i32 = arith.constant 0 : i32
    %c0_i32_0 = arith.constant 0 : i32
    return %arg0, %c0_i32 : i32, i32
  }
}

</mosaic_0001>

<llo_original>
// kernel: tpu_custom_call.1
$region0: #{tpu_custom_call.1}
  #allocation0 [shape = 'u32[]', space=smem, size = 0x4, offset = 0x4, fixed_abs, tag = 'smem constant byte address 0x4 - core index']
  #allocation1 [shape = 'u32[144,128]{1,0:T(1,128)}', space=vmem, size = 0x12000, scoped, tag = 'internal scratch']
  %s0 = inlined_call_operand.hbm [shape: f32[8,128], index: 0, kind: input, shape index: {}]
  %s1 = inlined_call_operand.hbm [shape: f32[128,128], index: 1, kind: input, shape index: {}]
  %s2 = inlined_call_operand.vmem [shape: f32[1,128], index: 2, kind: input, shape index: {}]
  %s3 = inlined_call_operand.hbm [shape: f32[8,128], index: 3, kind: output, shape index: {}]
  %s4 = sld [smem:[#allocation0]]
  $region30: #{tpu_custom_call.1} parent=0
    _
  %s6 = ssub.s32 1, %s4
  %s7 = scalar_select 0, %s6, %s4
  $region1: #{tpu_custom_call.1} parent=0
    #allocation2 [shape = 'u8[4096]{0}', space=vmem, size = 0x1000, scoped, tag = 'input window, operand 0, single buffered']
    #allocation3 [shape = 's32[1]{0}', space=sflag, size = 0x4, scoped, tag = 'scoped memory for tpu_custom_call.1']
    #allocation4 [shape = 's32[1]{0}', space=sflag, size = 0x4, scoped, tag = 'scoped memory for tpu_custom_call.1']
    #allocation5 [shape = 'u8[65536]{0}', space=vmem, size = 0x10000, scoped, tag = 'input window, operand 1, single buffered']
    #allocation6 [shape = 's32[1]{0}', space=sflag, size = 0x4, scoped, tag = 'scoped memory for tpu_custom_call.1']
    #allocation7 [shape = 'u8[4096]{0}', space=vmem, size = 0x1000, scoped, tag = 'output window, operand 0, single buffered']
    %8 = vsyncpa [#allocation3], 0
    %9 = vsyncpa [#allocation6], 0
    %10 = vsyncpa [#allocation4], 0
    // Predicated region
    $region2: #{tpu_custom_call.1} parent=1 // pred_check
      _
    $region3: #{tpu_custom_call.1} parent=1 // pred_check_branch
      %12 = sbr.rel (0) target = $region5
    $region4: #{tpu_custom_call.1} parent=1 // pred_region
      %s14 = ssub.s32 128, 128
      %15 = vsyncadd [#allocation3], %s14
      %s17 = sshll.u32 [#allocation2], 4
      %s18 = int_to_ptr.vmem [resolvable:$true] %s17
      %20 = dma.hbm_to_vmem [thread:$0]  %s0, 128, %s18, [#allocation3]
    $region5: #{tpu_custom_call.1} parent=1 // pred_fallthru
      _
    // Predicated region
    $region6: #{tpu_custom_call.1} parent=1 // pred_check
      _
    $region7: #{tpu_custom_call.1} parent=1 // pred_check_branch
      %22 = sbr.rel (0) target = $region9
    $region8: #{tpu_custom_call.1} parent=1 // pred_region
      %s24 = ssub.s32 2048, 2048
      %25 = vsyncadd [#allocation6], %s24
      %s26 = sshll.u32 [#allocation5], 4
      %s27 = int_to_ptr.vmem [resolvable:$true] %s26
      %32 = dma.hbm_to_vmem [thread:$0]  %s1, 2048, %s27, [#allocation6], 128, 128, 8
    $region9: #{tpu_custom_call.1} parent=1 // pred_fallthru
      _
    // Predicated region
    $region10: #{tpu_custom_call.1} parent=1 // pred_check
      _
    $region11: #{tpu_custom_call.1} parent=1 // pred_check_branch
      %34 = sbr.rel (0) target = $region13
    $region12: #{tpu_custom_call.1} parent=1 // pred_region
      _
    $region13: #{tpu_custom_call.1} parent=1 // pred_fallthru
      _
    // Predicated region
    $region14: #{tpu_custom_call.1} parent=1 // pred_check
      _
    $region15: #{tpu_custom_call.1} parent=1 // pred_check_branch
      %36 = sbr.rel (0) target = $region17
    $region16: #{tpu_custom_call.1} parent=1 // pred_region
      %37 = dma.done [#allocation3], 128
    $region17: #{tpu_custom_call.1} parent=1 // pred_fallthru
      _
    // Predicated region
    $region18: #{tpu_custom_call.1} parent=1 // pred_check
      _
    $region19: #{tpu_custom_call.1} parent=1 // pred_check_branch
      %39 = sbr.rel (0) target = $region21
    $region20: #{tpu_custom_call.1} parent=1 // pred_region
      %40 = dma.done [#allocation6], 2048
    $region21: #{tpu_custom_call.1} parent=1 // pred_fallthru
      _
    %v41 = vld [vmem:[#allocation2] sm:$0xff]
    %v42 = vld [vmem:[#allocation5] sm:$0xff]
    %v43 = vld [vmem:[#allocation5 + $0x8] sm:$0xff]
    %v44 = vld [vmem:[#allocation5 + $0x10] sm:$0xff]
    %v45 = vld [vmem:[#allocation5 + $0x18] sm:$0xff]
    %v46 = vld [vmem:[#allocation5 + $0x20] sm:$0xff]
    %v47 = vld [vmem:[#allocation5 + $0x28] sm:$0xff]
    %v48 = vld [vmem:[#allocation5 + $0x30] sm:$0xff]
    %v49 = vld [vmem:[#allocation5 + $0x38] sm:$0xff]
    %v50 = vld [vmem:[#allocation5 + $0x40] sm:$0xff]
    %v51 = vld [vmem:[#allocation5 + $0x48] sm:$0xff]
    %v52 = vld [vmem:[#allocation5 + $0x50] sm:$0xff]
    %v53 = vld [vmem:[#allocation5 + $0x58] sm:$0xff]
    %v54 = vld [vmem:[#allocation5 + $0x60] sm:$0xff]
    %v55 = vld [vmem:[#allocation5 + $0x68] sm:$0xff]
    %v56 = vld [vmem:[#allocation5 + $0x70] sm:$0xff]
    %v57 = vld [vmem:[#allocation5 + $0x78] sm:$0xff]
    %v58 = vld [vmem:[%s2] sm:$0x1]
    %v60 = vlaneseq
    %v61 = vshrl.u32 %v60, 7
    %v62 = vsub.s32 0, %v61
    %v63 = vrot.slane %v58, %v62
    %65 = vmatprep.subr.mxu0 0.0
    %66 = vmatpush1.msra.mxu0 %v42
    %67 = vmatprep.subr.mxu0 0.0
    %68 = vmatpush1.msra.mxu0 %v43
    %69 = vmatprep.subr.mxu0 0.0
    %70 = vmatpush1.msra.mxu0 %v44
    %71 = vmatprep.subr.mxu0 0.0
    %72 = vmatpush1.msra.mxu0 %v45
    %73 = vmatprep.subr.mxu0 0.0
    %74 = vmatpush1.msra.mxu0 %v46
    %75 = vmatprep.subr.mxu0 0.0
    %76 = vmatpush1.msra.mxu0 %v47
    %77 = vmatprep.subr.mxu0 0.0
    %78 = vmatpush1.msra.mxu0 %v48
    %79 = vmatprep.subr.mxu0 0.0
    %80 = vmatpush1.msra.mxu0 %v49
    %81 = vmatprep.subr.mxu0 0.0
    %82 = vmatpush1.msra.mxu0 %v50
    %83 = vmatprep.subr.mxu0 0.0
    %84 = vmatpush1.msra.mxu0 %v51
    %85 = vmatprep.subr.mxu0 0.0
    %86 = vmatpush1.msra.mxu0 %v52
    %87 = vmatprep.subr.mxu0 0.0
    %88 = vmatpush1.msra.mxu0 %v53
    %89 = vmatprep.subr.mxu0 0.0
    %90 = vmatpush1.msra.mxu0 %v54
    %91 = vmatprep.subr.mxu0 0.0
    %92 = vmatpush1.msra.mxu0 %v55
    %93 = vmatprep.subr.mxu0 0.0
    %94 = vmatpush1.msra.mxu0 %v56
    %95 = vmatprep.subr.mxu0 0.0
    %96 = vmatpush1.msra.mxu0 %v57
    %97 = vmatprep.subr.mxu0 0.0
    %98 = vmatpush1.msra.mxu0 0.0
    %99 = vmatprep.subr.mxu0 0.0
    %100 = vmatpush1.msra.mxu0 0.0
    %101 = vmatprep.subr.mxu0 0.0
    %102 = vmatpush1.msra.mxu0 0.0
    %103 = vmatprep.subr.mxu0 0.0
    %104 = vmatpush1.msra.mxu0 0.0
    %105 = vmatprep.subr.mxu0 0.0
    %106 = vmatpush1.msra.mxu0 0.0
    %107 = vmatprep.subr.mxu0 0.0
    %108 = vmatpush1.msra.mxu0 0.0
    %109 = vmatprep.subr.mxu0 0.0
    %110 = vmatpush1.msra.mxu0 0.0
    %111 = vmatprep.subr.mxu0 0.0
    %112 = vmatpush1.msra.mxu0 0.0
    %113 = vmatprep.subr.mxu0 0.0
    %114 = vmatpush1.msra.mxu0 0.0
    %115 = vmatprep.subr.mxu0 0.0
    %116 = vmatpush1.msra.mxu0 0.0
    %117 = vmatprep.subr.mxu0 0.0
    %118 = vmatpush1.msra.mxu0 0.0
    %119 = vmatprep.subr.mxu0 0.0
    %120 = vmatpush1.msra.mxu0 0.0
    %121 = vmatprep.subr.mxu0 0.0
    %122 = vmatpush1.msra.mxu0 0.0
    %123 = vmatprep.subr.mxu0 0.0
    %124 = vmatpush1.msra.mxu0 0.0
    %125 = vmatprep.subr.mxu0 0.0
    %126 = vmatpush1.msra.mxu0 0.0
    %127 = vmatprep.subr.mxu0 0.0
    %128 = vmatpush1.msra.mxu0 0.0
    %129 = vmatprep.mubr.f32.mxu0 0.0
    %130 = vmatmul.mubr.f32.gmra.mrb[0].mxu0 %v41
    %v131 = vpop.f32.mrb[0].mxu0
    %v132 = vadd.f32 %v63, %v131
    %v133 = vpop.f32.mrb[0].mxu0
    %134 = vdwg.mxu0
    %135 = vst [vmem:[#allocation7] sm:$0xff] %v132
    // Predicated region
    $region22: #{tpu_custom_call.1} parent=1 // pred_check
      _
    $region23: #{tpu_custom_call.1} parent=1 // pred_check_branch
      %137 = sbr.rel (0) target = $region25
    $region24: #{tpu_custom_call.1} parent=1 // pred_region
      %s139 = ssub.s32 128, 128
      %140 = vsyncadd [#allocation4], %s139
      %s142 = sshll.u32 [#allocation7], 4
      %s143 = int_to_ptr.vmem [resolvable:$true] %s142
      %145 = dma.vmem_to_hbm [thread:$0]  %s143, 128, %s3, [#allocation4]
    $region25: #{tpu_custom_call.1} parent=1 // pred_fallthru
      _
    // Predicated region
    $region26: #{tpu_custom_call.1} parent=1 // pred_check
      _
    $region27: #{tpu_custom_call.1} parent=1 // pred_check_branch
      %147 = sbr.rel (0) target = $region29
    $region28: #{tpu_custom_call.1} parent=1 // pred_region
      %148 = dma.done [#allocation4], 128
    $region29: #{tpu_custom_call.1} parent=1 // pred_fallthru
      _
    %149 = vsyncpa [#allocation3], 1
    %150 = vsyncpa [#allocation6], 1
    %151 = vsyncpa [#allocation4], 1

// kernel: tpu_custom_call.1
$region0: #{tpu_custom_call.1}
  #allocation0 [shape = 'u32[]', space=smem, size = 0x4, offset = 0x4, fixed_abs, tag = 'smem constant byte address 0x4 - core index']
  #allocation1 [shape = 'u32[144,128]{1,0:T(1,128)}', space=vmem, size = 0x12000, scoped, tag = 'internal scratch']
  %s0 = inlined_call_operand.hbm [shape: f32[8,128], index: 0, kind: input, shape index: {}]
  %s1 = inlined_call_operand.hbm [shape: f32[128,128], index: 1, kind: input, shape index: {}]
  %s2 = inlined_call_operand.vmem [shape: f32[1,128], index: 2, kind: input, shape index: {}]
  %s3 = inlined_call_operand.hbm [shape: f32[8,128], index: 3, kind: output, shape index: {}]
  %s4 = sld [smem:[#allocation0]]
  $region30: #{tpu_custom_call.1} parent=0
    _
  %s6 = ssub.s32 1, %s4
  %s7 = scalar_select 0, %s6, %s4
  $region1: #{tpu_custom_call.1} parent=0
    #allocation2 [shape = 'u8[4096]{0}', space=vmem, size = 0x1000, scoped, tag = 'input window, operand 0, single buffered']
    #allocation3 [shape = 's32[1]{0}', space=sflag, size = 0x4, scoped, tag = 'scoped memory for tpu_custom_call.1']
    #allocation4 [shape = 's32[1]{0}', space=sflag, size = 0x4, scoped, tag = 'scoped memory for tpu_custom_call.1']
    #allocation5 [shape = 'u8[65536]{0}', space=vmem, size = 0x10000, scoped, tag = 'input window, operand 1, single buffered']
    #allocation6 [shape = 's32[1]{0}', space=sflag, size = 0x4, scoped, tag = 'scoped memory for tpu_custom_call.1']
    #allocation7 [shape = 'u8[4096]{0}', space=vmem, size = 0x1000, scoped, tag = 'output window, operand 0, single buffered']
    %8 = vsyncpa [#allocation3], 0
    %9 = vsyncpa [#allocation6], 0
    %10 = vsyncpa [#allocation4], 0
    // Predicated region
    $region2: #{tpu_custom_call.1} parent=1 // pred_check
      _
    $region3: #{tpu_custom_call.1} parent=1 // pred_check_branch
      %12 = sbr.rel (0) target = $region5
    $region4: #{tpu_custom_call.1} parent=1 // pred_region
      %s14 = ssub.s32 128, 128
      %15 = vsyncadd [#allocation3], %s14
      %s17 = sshll.u32 [#allocation2], 4
      %s18 = int_to_ptr.vmem [resolvable:$true] %s17
      %20 = dma.hbm_to_vmem [thread:$0]  %s0, 128, %s18, [#allocation3]
    $region5: #{tpu_custom_call.1} parent=1 // pred_fallthru
      _
    // Predicated region
    $region6: #{tpu_custom_call.1} parent=1 // pred_check
      _
    $region7: #{tpu_custom_call.1} parent=1 // pred_check_branch
      %22 = sbr.rel (0) target = $region9
    $region8: #{tpu_custom_call.1} parent=1 // pred_region
      %s24 = ssub.s32 2048, 2048
      %25 = vsyncadd [#allocation6], %s24
      %s26 = sshll.u32 [#allocation5], 4
      %s27 = int_to_ptr.vmem [resolvable:$true] %s26
      %32 = dma.hbm_to_vmem [thread:$0]  %s1, 2048, %s27, [#allocation6], 128, 128, 8
    $region9: #{tpu_custom_call.1} parent=1 // pred_fallthru
      _
    // Predicated region
    $region10: #{tpu_custom_call.1} parent=1 // pred_check
      _
    $region11: #{tpu_custom_call.1} parent=1 // pred_check_branch
      %34 = sbr.rel (0) target = $region13
    $region12: #{tpu_custom_call.1} parent=1 // pred_region
      _
    $region13: #{tpu_custom_call.1} parent=1 // pred_fallthru
      _
    // Predicated region
    $region14: #{tpu_custom_call.1} parent=1 // pred_check
      _
    $region15: #{tpu_custom_call.1} parent=1 // pred_check_branch
      %36 = sbr.rel (0) target = $region17
    $region16: #{tpu_custom_call.1} parent=1 // pred_region
      %37 = dma.done [#allocation3], 128
    $region17: #{tpu_custom_call.1} parent=1 // pred_fallthru
      _
    // Predicated region
    $region18: #{tpu_custom_call.1} parent=1 // pred_check
      _
    $region19: #{tpu_custom_call.1} parent=1 // pred_check_branch
      %39 = sbr.rel (0) target = $region21
    $region20: #{tpu_custom_call.1} parent=1 // pred_region
      %40 = dma.done [#allocation6], 2048
    $region21: #{tpu_custom_call.1} parent=1 // pred_fallthru
      _
    %v41 = vld [vmem:[#allocation2] sm:$0xff]
    %v42 = vld [vmem:[#allocation5] sm:$0xff]
    %v43 = vld [vmem:[#allocation5 + $0x8] sm:$0xff]
    %v44 = vld [vmem:[#allocation5 + $0x10] sm:$0xff]
    %v45 = vld [vmem:[#allocation5 + $0x18] sm:$0xff]
    %v46 = vld [vmem:[#allocation5 + $0x20] sm:$0xff]
    %v47 = vld [vmem:[#allocation5 + $0x28] sm:$0xff]
    %v48 = vld [vmem:[#allocation5 + $0x30] sm:$0xff]
    %v49 = vld [vmem:[#allocation5 + $0x38] sm:$0xff]
    %v50 = vld [vmem:[#allocation5 + $0x40] sm:$0xff]
    %v51 = vld [vmem:[#allocation5 + $0x48] sm:$0xff]
    %v52 = vld [vmem:[#allocation5 + $0x50] sm:$0xff]
    %v53 = vld [vmem:[#allocation5 + $0x58] sm:$0xff]
    %v54 = vld [vmem:[#allocation5 + $0x60] sm:$0xff]
    %v55 = vld [vmem:[#allocation5 + $0x68] sm:$0xff]
    %v56 = vld [vmem:[#allocation5 + $0x70] sm:$0xff]
    %v57 = vld [vmem:[#allocation5 + $0x78] sm:$0xff]
    %v58 = vld [vmem:[%s2] sm:$0x1]
    %v60 = vlaneseq
    %v61 = vshrl.u32 %v60, 7
    %v62 = vsub.s32 0, %v61
    %v63 = vrot.slane %v58, %v62
    %65 = vmatprep.subr.mxu0 0.0
    %66 = vmatpush1.msra.mxu0 %v42
    %67 = vmatprep.subr.mxu0 0.0
    %68 = vmatpush1.msra.mxu0 %v43
    %69 = vmatprep.subr.mxu0 0.0
    %70 = vmatpush1.msra.mxu0 %v44
    %71 = vmatprep.subr.mxu0 0.0
    %72 = vmatpush1.msra.mxu0 %v45
    %73 = vmatprep.subr.mxu0 0.0
    %74 = vmatpush1.msra.mxu0 %v46
    %75 = vmatprep.subr.mxu0 0.0
    %76 = vmatpush1.msra.mxu0 %v47
    %77 = vmatprep.subr.mxu0 0.0
    %78 = vmatpush1.msra.mxu0 %v48
    %79 = vmatprep.subr.mxu0 0.0
    %80 = vmatpush1.msra.mxu0 %v49
    %81 = vmatprep.subr.mxu0 0.0
    %82 = vmatpush1.msra.mxu0 %v50
    %83 = vmatprep.subr.mxu0 0.0
    %84 = vmatpush1.msra.mxu0 %v51
    %85 = vmatprep.subr.mxu0 0.0
    %86 = vmatpush1.msra.mxu0 %v52
    %87 = vmatprep.subr.mxu0 0.0
    %88 = vmatpush1.msra.mxu0 %v53
    %89 = vmatprep.subr.mxu0 0.0
    %90 = vmatpush1.msra.mxu0 %v54
    %91 = vmatprep.subr.mxu0 0.0
    %92 = vmatpush1.msra.mxu0 %v55
    %93 = vmatprep.subr.mxu0 0.0
    %94 = vmatpush1.msra.mxu0 %v56
    %95 = vmatprep.subr.mxu0 0.0
    %96 = vmatpush1.msra.mxu0 %v57
    %97 = vmatprep.subr.mxu0 0.0
    %98 = vmatpush1.msra.mxu0 0.0
    %99 = vmatprep.subr.mxu0 0.0
    %100 = vmatpush1.msra.mxu0 0.0
    %101 = vmatprep.subr.mxu0 0.0
    %102 = vmatpush1.msra.mxu0 0.0
    %103 = vmatprep.subr.mxu0 0.0
    %104 = vmatpush1.msra.mxu0 0.0
    %105 = vmatprep.subr.mxu0 0.0
    %106 = vmatpush1.msra.mxu0 0.0
    %107 = vmatprep.subr.mxu0 0.0
    %108 = vmatpush1.msra.mxu0 0.0
    %109 = vmatprep.subr.mxu0 0.0
    %110 = vmatpush1.msra.mxu0 0.0
    %111 = vmatprep.subr.mxu0 0.0
    %112 = vmatpush1.msra.mxu0 0.0
    %113 = vmatprep.subr.mxu0 0.0
    %114 = vmatpush1.msra.mxu0 0.0
    %115 = vmatprep.subr.mxu0 0.0
    %116 = vmatpush1.msra.mxu0 0.0
    %117 = vmatprep.subr.mxu0 0.0
    %118 = vmatpush1.msra.mxu0 0.0
    %119 = vmatprep.subr.mxu0 0.0
    %120 = vmatpush1.msra.mxu0 0.0
    %121 = vmatprep.subr.mxu0 0.0
    %122 = vmatpush1.msra.mxu0 0.0
    %123 = vmatprep.subr.mxu0 0.0
    %124 = vmatpush1.msra.mxu0 0.0
    %125 = vmatprep.subr.mxu0 0.0
    %126 = vmatpush1.msra.mxu0 0.0
    %127 = vmatprep.subr.mxu0 0.0
    %128 = vmatpush1.msra.mxu0 0.0
    %129 = vmatprep.mubr.f32.mxu0 0.0
    %130 = vmatmul.mubr.f32.gmra.mrb[0].mxu0 %v41
    %v131 = vpop.f32.mrb[0].mxu0
    %v132 = vadd.f32 %v63, %v131
    %v133 = vpop.f32.mrb[0].mxu0
    %134 = vdwg.mxu0
    %135 = vst [vmem:[#allocation7] sm:$0xff] %v132
    // Predicated region
    $region22: #{tpu_custom_call.1} parent=1 // pred_check
      _
    $region23: #{tpu_custom_call.1} parent=1 // pred_check_branch
      %137 = sbr.rel (0) target = $region25
    $region24: #{tpu_custom_call.1} parent=1 // pred_region
      %s139 = ssub.s32 128, 128
      %140 = vsyncadd [#allocation4], %s139
      %s142 = sshll.u32 [#allocation7], 4
      %s143 = int_to_ptr.vmem [resolvable:$true] %s142
      %145 = dma.vmem_to_hbm [thread:$0]  %s143, 128, %s3, [#allocation4]
    $region25: #{tpu_custom_call.1} parent=1 // pred_fallthru
      _
    // Predicated region
    $region26: #{tpu_custom_call.1} parent=1 // pred_check
      _
    $region27: #{tpu_custom_call.1} parent=1 // pred_check_branch
      %147 = sbr.rel (0) target = $region29
    $region28: #{tpu_custom_call.1} parent=1 // pred_region
      %148 = dma.done [#allocation4], 128
    $region29: #{tpu_custom_call.1} parent=1 // pred_fallthru
      _
    %149 = vsyncpa [#allocation3], 1
    %150 = vsyncpa [#allocation6], 1
    %151 = vsyncpa [#allocation4], 1

</llo_original>
